<compile_context>
chip_gen: v7x
topology: tpu7x:2x2x1
jax: 0.10.0
libtpu: 0.0.40
codegen_flags: <defaults>
</compile_context>

<pallas_src>
import functools
import math

import jax
import jax.numpy as jnp
from jax.experimental import pallas as pl
from jax.experimental.pallas import tpu as pltpu


def _round_up(v, m):
    return ((v + m - 1) // m) * m


def _pick_tile(size, preferred):
    return min(_round_up(preferred, 8), _round_up(size, 8))


# ---------------------------------------------------------------------------
# Kernel 1: row-tiled linear  y = x @ w + b   (bf16 MXU inputs, f32 accumulate)
# ---------------------------------------------------------------------------
def _linear_kernel(x_ref, w_ref, b_ref, o_ref):
    o_ref[...] = (
        jnp.dot(x_ref[...], w_ref[...], preferred_element_type=jnp.float32)
        + b_ref[...]
    ).astype(o_ref.dtype)


def _tiled_linear(x, w, b, *, tile, out_dtype):
    """x: (S, Cin) with S % tile == 0, w: (Cin, Cout), b: (1, Cout) -> (S, Cout)."""
    S, Cin = x.shape
    Cout = w.shape[1]
    n = S // tile
    return pl.pallas_call(
        _linear_kernel,
        grid=(n,),
        in_specs=[
            pl.BlockSpec((tile, Cin), lambda i: (i, 0)),
            pl.BlockSpec((Cin, Cout), lambda i: (0, 0)),   # resident weight
            pl.BlockSpec((1, Cout), lambda i: (0, 0)),     # resident bias
        ],
        out_specs=pl.BlockSpec((tile, Cout), lambda i: (i, 0)),
        out_shape=jax.ShapeDtypeStruct((S, Cout), out_dtype),
        compiler_params=pltpu.CompilerParams(dimension_semantics=("parallel",)),
    )(x, w, b)


# ---------------------------------------------------------------------------
# Kernel 2: flash attention (all heads batched) + fused output projection
#   grid = (num_q_tiles, num_kv_tiles); the kv axis is the online-softmax reduction.
# ---------------------------------------------------------------------------
def _flash_kernel(q_ref, k_ref, v_ref, wp_ref, bp_ref, o_ref,
                  m_scr, l_scr, acc_scr,
                  *, num_heads, kv_tile, kv_valid, needs_mask):
    j = pl.program_id(1)

    @pl.when(j == 0)
    def _init():
        m_scr[...] = jnp.full_like(m_scr, -jnp.inf)
        l_scr[...] = jnp.zeros_like(l_scr)
        acc_scr[...] = jnp.zeros_like(acc_scr)

    # (H, TQ, Dh) x (H, TK, Dh) -> (H, TQ, TK): one batched dot_general for all heads,
    # contracting the last dims (no explicit transposes). q is pre-scaled by 1/sqrt(Dh).
    s = jnp.einsum("hqd,hkd->hqk", q_ref[...], k_ref[...],
                   preferred_element_type=jnp.float32)

    if needs_mask:
        # Mask out zero-padded key rows (padding only exists at the tail).
        col = j * kv_tile + jax.lax.broadcasted_iota(jnp.int32, (1, 1, kv_tile), 2)
        s = jnp.where(col < kv_valid, s, -1e30)

    m_prev = m_scr[...]
    m_new = jnp.maximum(m_prev, jnp.max(s, axis=-1, keepdims=True))
    alpha = jnp.exp(m_prev - m_new)
    p = jnp.exp(s - m_new)
    l_scr[...] = alpha * l_scr[...] + jnp.sum(p, axis=-1, keepdims=True)
    acc_scr[...] = alpha * acc_scr[...] + jnp.einsum(
        "hqk,hkd->hqd", p.astype(v_ref.dtype), v_ref[...],
        preferred_element_type=jnp.float32)
    m_scr[...] = m_new

    @pl.when(j == pl.num_programs(1) - 1)
    def _finalize():
        tq, c = o_ref.shape
        inv_l = pl.reciprocal(l_scr[...], approx=True)          # EUP, ~free
        out = jnp.zeros((tq, c), jnp.float32)
        # Fused output projection: one small (TQ, Dh) x (Dh, C) matmul per head,
        # run only once per query tile; keeps the HBM output lane-dense (TQ, C).
        for h in range(num_heads):
            attn_h = (acc_scr[h] * inv_l[h]).astype(wp_ref.dtype)
            out = out + jnp.dot(attn_h, wp_ref[h],
                                preferred_element_type=jnp.float32)
        o_ref[...] = (out + bp_ref[...]).astype(o_ref.dtype)


# ---------------------------------------------------------------------------
# Wrapper
# ---------------------------------------------------------------------------
def multi_head_cross_attention(x, cond, params, num_heads, *,
                               q_tile=256, kv_tile=256,
                               compute_dtype=jnp.bfloat16):
    """mask=None forward: B*N flattened queries attend to all B*M flattened keys,
    exactly matching the module's .view(1, -1, H, Dh) + memory_efficient_attention."""
    B, N, C = x.shape
    Bc, M, Cc = cond.shape
    assert B == Bc and C == Cc and C % num_heads == 0
    Dh = C // num_heads
    scale = 1.0 / math.sqrt(Dh)
    f32 = jnp.float32

    Sq, Sk = B * N, B * M
    TQ = _pick_tile(Sq, q_tile)
    TK = _pick_tile(Sk, kv_tile)
    Sqp = _round_up(Sq, TQ)
    Skp = _round_up(Sk, TK)

    xf = x.reshape(Sq, C).astype(compute_dtype)
    cf = cond.reshape(Sk, C).astype(compute_dtype)
    if Sqp != Sq:
        xf = jnp.pad(xf, ((0, Sqp - Sq), (0, 0)))
    if Skp != Sk:
        cf = jnp.pad(cf, ((0, Skp - Sk), (0, 0)))

    # Fold 1/sqrt(Dh) into the q projection (cheaper than scaling every score tile).
    wq = (params["wq"].astype(f32) * scale).astype(compute_dtype)
    bq = params["bq"].astype(f32) * scale
    wkv = params["wkv"].astype(compute_dtype)
    bkv = params["bkv"].astype(f32)
    wp = params["wp"].astype(compute_dtype)
    bp = params["bp"].astype(f32)

    # ---- projections (tiled, pipelined, lane-dense outputs) ----
    q2d = _tiled_linear(xf, wq, bq, tile=TQ, out_dtype=compute_dtype)      # (Sqp, C)
    kv2d = _tiled_linear(cf, wkv, bkv, tile=TK, out_dtype=compute_dtype)   # (Skp, 2C)

    # Head-major layout plumbing in plain XLA (outside the kernels).
    q_hm = q2d.reshape(Sqp, num_heads, Dh).transpose(1, 0, 2)              # (H, Sqp, Dh)
    k_hm = kv2d[:, :C].reshape(Skp, num_heads, Dh).transpose(1, 0, 2)      # (H, Skp, Dh)
    v_hm = kv2d[:, C:].reshape(Skp, num_heads, Dh).transpose(1, 0, 2)      # (H, Skp, Dh)
    wp_hm = wp.reshape(num_heads, Dh, C)                                   # (H, Dh, C)

    nq, nk = Sqp // TQ, Skp // TK

    out = pl.pallas_call(
        functools.partial(_flash_kernel, num_heads=num_heads, kv_tile=TK,
                          kv_valid=Sk, needs_mask=(Skp != Sk)),
        grid=(nq, nk),
        in_specs=[
            pl.BlockSpec((num_heads, TQ, Dh), lambda i, j: (0, i, 0)),  # q tile
            pl.BlockSpec((num_heads, TK, Dh), lambda i, j: (0, j, 0)),  # k tile
            pl.BlockSpec((num_heads, TK, Dh), lambda i, j: (0, j, 0)),  # v tile
            pl.BlockSpec((num_heads, Dh, C), lambda i, j: (0, 0, 0)),   # resident wp
            pl.BlockSpec((1, C), lambda i, j: (0, 0)),                  # resident bp
        ],
        out_specs=pl.BlockSpec((TQ, C), lambda i, j: (i, 0)),
        out_shape=jax.ShapeDtypeStruct((Sqp, C), compute_dtype),
        scratch_shapes=[
            pltpu.VMEM((num_heads, TQ, 1), f32),    # running max
            pltpu.VMEM((num_heads, TQ, 1), f32),    # running sum
            pltpu.VMEM((num_heads, TQ, Dh), f32),   # running accumulator
        ],
        compiler_params=pltpu.CompilerParams(
            dimension_semantics=("parallel", "arbitrary")),
    )(q_hm, k_hm, v_hm, wp_hm, bp)

    return out[:Sq].reshape(B, N, C)


# ---------------------------------------------------------------------------
# Pure-JAX reference (mirrors the module's math and the kernel's bf16 boundaries)
# ---------------------------------------------------------------------------
def _reference(x, cond, params, num_heads, compute_dtype=jnp.bfloat16):
    B, N, C = x.shape
    _, M, _ = cond.shape
    Dh = C // num_heads
    f32 = jnp.float32
    xf = x.reshape(B * N, C).astype(compute_dtype)
    cf = cond.reshape(B * M, C).astype(compute_dtype)
    wq = params["wq"].astype(compute_dtype)
    wkv = params["wkv"].astype(compute_dtype)
    wp = params["wp"].astype(compute_dtype)
    bq, bkv, bp = (params["bq"].astype(f32), params["bkv"].astype(f32),
                   params["bp"].astype(f32))
    q = (jnp.dot(xf, wq, preferred_element_type=f32) + bq) / math.sqrt(Dh)
    kv = jnp.dot(cf, wkv, preferred_element_type=f32) + bkv
    k, v = kv[:, :C], kv[:, C:]
    q = q.astype(compute_dtype).reshape(-1, num_heads, Dh)
    k = k.astype(compute_dtype).reshape(-1, num_heads, Dh)
    v = v.astype(compute_dtype).reshape(-1, num_heads, Dh)
    s = jnp.einsum("qhd,khd->hqk", q, k, preferred_element_type=f32)
    p = jax.nn.softmax(s, axis=-1)
    o = jnp.einsum("hqk,khd->qhd", p.astype(compute_dtype), v,
                   preferred_element_type=f32)
    o = o.reshape(-1, C).astype(compute_dtype)
    o = jnp.dot(o, wp, preferred_element_type=f32) + bp
    return o.reshape(B, N, C)


def init_params(key, d_model):
    """PyTorch-Linear-style uniform init; weights stored (in, out) = W_torch.T."""
    ks = jax.random.split(key, 6)
    bound = 1.0 / math.sqrt(d_model)
    u = lambda k, shape: jax.random.uniform(k, shape, jnp.float32, -bound, bound)
    return {
        "wq": u(ks[0], (d_model, d_model)),
        "bq": u(ks[1], (1, d_model)),
        "wkv": u(ks[2], (d_model, 2 * d_model)),
        "bkv": u(ks[3], (1, 2 * d_model)),
        "wp": u(ks[4], (d_model, d_model)),
        "bp": u(ks[5], (1, d_model)),
    }


if __name__ == "__main__":
    # TODO(synk): the `mask` (xformers BlockDiagonalMask) path is not implemented;
    # only the mask=None forward of the module is reproduced.
    B, N, M, C, H = 2, 9, 11, 32, 4   # odd seq lengths exercise padding + key masking

    key = jax.random.PRNGKey(0)
    kx, kc, kp = jax.random.split(key, 3)
    x = jax.random.normal(kx, (B, N, C), jnp.float32)
    cond = jax.random.normal(kc, (B, M, C), jnp.float32)
    params = init_params(kp, C)

    # Tiny tiles so the test actually exercises multi-tile pipelining and the
    # online-softmax kv loop; production sizes would use 256-512 tiles.
    out = multi_head_cross_attention(x, cond, params, num_heads=H,
                                     q_tile=16, kv_tile=8)
    out = jax.block_until_ready(out)

    ref = _reference(x, cond, params, num_heads=H)
    assert out.shape == (B, N, C)
    assert jnp.allclose(out.astype(jnp.float32), ref.astype(jnp.float32),
                        atol=2e-2, rtol=2e-2), "mismatch vs reference"

    print("KERNEL_OK")
</pallas_src>

<mosaic_0001>
module attributes {stable_mosaic.version = 11 : i64} {
  func.func @_linear_kernel(%arg0: i32, %arg1: memref<16x32xbf16, #tpu.memory_space<vmem>>, %arg2: memref<32x32xbf16, #tpu.memory_space<vmem>>, %arg3: memref<1x32xf32, #tpu.memory_space<vmem>>, %arg4: memref<16x32xbf16, #tpu.memory_space<vmem>>) attributes {dimension_semantics = [#tpu.dimension_semantics<parallel>], iteration_bounds = array<i64: 2>, scalar_prefetch = 0 : i64, scratch_operands = 0 : i64, tpu.core_type = #tpu.core_type<tc>, window_params = [{transform_indices = @transform_0, window_bounds = array<i64: 16, 32>}, {pipeline_mode = #tpu.pipeline_mode<synchronous>, transform_indices = @transform_1, window_bounds = array<i64: 32, 32>}, {pipeline_mode = #tpu.pipeline_mode<synchronous>, transform_indices = @transform_2, window_bounds = array<i64: 1, 32>}, {transform_indices = @transform_3, window_bounds = array<i64: 16, 32>}]} {
    %c0 = arith.constant 0 : index
    %c0_0 = arith.constant 0 : index
    %0 = vector.load %arg1[%c0, %c0_0] : memref<16x32xbf16, #tpu.memory_space<vmem>>, vector<16x32xbf16>
    %c0_1 = arith.constant 0 : index
    %c0_2 = arith.constant 0 : index
    %1 = vector.load %arg2[%c0_1, %c0_2] : memref<32x32xbf16, #tpu.memory_space<vmem>>, vector<32x32xbf16>
    %cst = arith.constant dense<0.000000e+00> : vector<16x32xf32>
    %2 = tpu.matmul %0, %1, %cst {dimension_numbers = #tpu.dot_dimension_numbers<[1], [0], [0], [1], [0, 0, 1, 1], [], []>} : vector<16x32xbf16>, vector<32x32xbf16>, vector<16x32xf32> -> vector<16x32xf32>
    %c0_3 = arith.constant 0 : index
    %c0_4 = arith.constant 0 : index
    %3 = vector.load %arg3[%c0_3, %c0_4] : memref<1x32xf32, #tpu.memory_space<vmem>>, vector<1x32xf32>
    %4 = vector.broadcast %3 : vector<1x32xf32> to vector<16x32xf32>
    %5 = arith.addf %2, %4 : vector<16x32xf32>
    %6 = arith.truncf %5 : vector<16x32xf32> to vector<16x32xbf16>
    %c0_5 = arith.constant 0 : index
    %c0_6 = arith.constant 0 : index
    %7 = vector.load %arg4[%c0_5, %c0_6] : memref<16x32xbf16, #tpu.memory_space<vmem>>, vector<16x32xbf16>
    tpu.vector_store %arg4[%c0_5, %c0_6], %6 {strides = array<i32>} : memref<16x32xbf16, #tpu.memory_space<vmem>>, vector<16x32xbf16>,
    return
  }
  func.func @transform_0(%arg0: i32) -> (i32, i32) {
    %c0_i32 = arith.constant 0 : i32
    %c0_i32_0 = arith.constant 0 : i32
    return %arg0, %c0_i32 : i32, i32
  }
  func.func @transform_1(%arg0: i32) -> (i32, i32) {
    %c0_i32 = arith.constant 0 : i32
    %c0_i32_0 = arith.constant 0 : i32
    %c0_i32_1 = arith.constant 0 : i32
    return %c0_i32, %c0_i32_0 : i32, i32
  }
  func.func @transform_2(%arg0: i32) -> (i32, i32) {
    %c0_i32 = arith.constant 0 : i32
    %c0_i32_0 = arith.constant 0 : i32
    %c0_i32_1 = arith.constant 0 : i32
    return %c0_i32, %c0_i32_0 : i32, i32
  }
  func.func @transform_3(%arg0: i32) -> (i32, i32) {
    %c0_i32 = arith.constant 0 : i32
    %c0_i32_0 = arith.constant 0 : i32
    return %arg0, %c0_i32 : i32, i32
  }
}

</mosaic_0001>

<llo_original>
// kernel: tpu_custom_call.1
$region0: #{tpu_custom_call.1}
  #allocation0 [shape = 'u32[]', space=smem, size = 0x4, offset = 0x4, fixed_abs, tag = 'smem constant byte address 0x4 - core index']
  #allocation1 [shape = 'u32[144,128]{1,0:T(1,128)}', space=vmem, size = 0x12000, scoped, tag = 'internal scratch']
  %s0 = inlined_call_operand.hbm [shape: bf16[32,32], index: 0, kind: input, shape index: {}]
  %s1 = inlined_call_operand.hbm [shape: bf16[32,32], index: 1, kind: input, shape index: {}]
  %s2 = inlined_call_operand.vmem [shape: f32[1,32], index: 2, kind: input, shape index: {}]
  %s3 = inlined_call_operand.hbm [shape: bf16[32,32], index: 3, kind: output, shape index: {}]
  %s4 = sld [smem:[#allocation0]]
  $region53: #{tpu_custom_call.1} parent=0
    _
  %s6 = ssub.s32 1, %s4
  %s7 = scalar_select 0, %s6, %s4
  $region1: #{tpu_custom_call.1} parent=0
    #allocation2 [shape = 'u8[8192]{0}', space=vmem, size = 0x2000, scoped, tag = 'input window, operand 0']
    #allocation3 [shape = 's32[2]{0}', space=sflag, size = 0x8, scoped, tag = 'scoped memory for tpu_custom_call.1']
    #allocation4 [shape = 's32[2]{0}', space=sflag, size = 0x8, scoped, tag = 'scoped memory for tpu_custom_call.1']
    #allocation5 [shape = 'u8[8192]{0}', space=vmem, size = 0x2000, scoped, tag = 'input window, operand 1, single buffered']
    #allocation6 [shape = 's32[1]{0}', space=sflag, size = 0x4, scoped, tag = 'scoped memory for tpu_custom_call.1']
    #allocation7 [shape = 'u8[8192]{0}', space=vmem, size = 0x2000, scoped, tag = 'output window, operand 0']
    %8 = vsyncpa [#allocation3], 0
    %s9 = scalar_lea.sflag [#allocation3], 1
    %10 = vsyncpa %s9, 0
    %11 = vsyncpa [#allocation6], 0
    %12 = vsyncpa [#allocation4], 0
    %s13 = scalar_lea.sflag [#allocation4], 1
    %14 = vsyncpa %s13, 0
    loop: start=0, step=1, limit=4
    $region2: #{tpu_custom_call.1} parent=1 // loop_pre_header
      _
    $region3: #{tpu_custom_call.1} parent=1 // loop_header
      %s16 = sphi 0, %s20
      %p17 = scmp.ge.s32.totalorder %s16, 4
      %s26 = sphi 0, %s28
      %s29 = sphi 0, %s26
      %s30 = sphi 0, %s29
      %s46 = sphi 0, %s30
      %s50 = sphi 0, %s50
      %s52 = sphi 0, %s50
      %s53 = sphi 0, %s52
      %s67 = sphi 0, %s53
      %s71 = sphi 0, %s71
      %s73 = sphi 0, %s71
      %s74 = sphi 0, %s73
      %s88 = sphi 0, %s74
      %s94 = sphi 0, %s96
      %s97 = sphi 0, %s94
      %s98 = sphi 0, %s97
      %s114 = sphi 0, %s98
    $region4: #{tpu_custom_call.1} parent=1 // loop_header_branch
      %19 = sbr.rel (%p17) target = $region8
    $region5: #{tpu_custom_call.1} parent=1 // loop_body
      %s21 = ssub.s32 %s16, 1
      %s22 = ssub.s32 %s16, 2
      %s23 = sadd.s32 %s16, 1
      %s24 = ssub.s32 %s16, %s23
      %p25 = scmp.eq.s32.totalorder %s24, 0
      %s27 = sadd.s32 %s26, 1
      %s28 = scalar_select %p25, %s26, %s27
      %p31 = pneg %p25
      %p32 = scmp.eq.s32.totalorder %s16, 1
      %p33 = por %p31, %p32
      %p34 = scmp.ne.s32.totalorder %s26, %s29
      %p35 = scmp.eq.s32.totalorder %s16, 0
      %p36 = por %p34, %p35
      %p37 = scmp.ne.s32.totalorder %s26, %s29
      %p38 = scmp.eq.s32.totalorder %s21, 1
      %p39 = por %p37, %p38
      %p40 = scmp.ne.s32.totalorder %s29, %s30
      %p41 = scmp.eq.s32.totalorder %s21, 0
      %p42 = por %p40, %p41
      %p43 = scmp.ne.s32.totalorder %s29, %s30
      %p44 = scmp.eq.s32.totalorder %s22, 1
      %p45 = por %p43, %p44
      %p47 = scmp.ne.s32.totalorder %s30, %s46
      %p48 = scmp.eq.s32.totalorder %s22, 0
      %p49 = por %p47, %p48
      %s51 = sadd.s32 %s50, 1
      %p54 = scmp.eq.s32.totalorder %s16, 1
      %p55 = scmp.ne.s32.totalorder %s50, %s52
      %p56 = scmp.eq.s32.totalorder %s16, 0
      %p57 = por %p55, %p56
      %p58 = scmp.ne.s32.totalorder %s50, %s52
      %p59 = scmp.eq.s32.totalorder %s21, 1
      %p60 = por %p58, %p59
      %p61 = scmp.ne.s32.totalorder %s52, %s53
      %p62 = scmp.eq.s32.totalorder %s21, 0
      %p63 = por %p61, %p62
      %p64 = scmp.ne.s32.totalorder %s52, %s53
      %p65 = scmp.eq.s32.totalorder %s22, 1
      %p66 = por %p64, %p65
      %p68 = scmp.ne.s32.totalorder %s53, %s67
      %p69 = scmp.eq.s32.totalorder %s22, 0
      %p70 = por %p68, %p69
      %s72 = sadd.s32 %s71, 1
      %p75 = scmp.eq.s32.totalorder %s16, 1
      %p76 = scmp.ne.s32.totalorder %s71, %s73
      %p77 = scmp.eq.s32.totalorder %s16, 0
      %p78 = por %p76, %p77
      %p79 = scmp.ne.s32.totalorder %s71, %s73
      %p80 = scmp.eq.s32.totalorder %s21, 1
      %p81 = por %p79, %p80
      %p82 = scmp.ne.s32.totalorder %s73, %s74
      %p83 = scmp.eq.s32.totalorder %s21, 0
      %p84 = por %p82, %p83
      %p85 = scmp.ne.s32.totalorder %s73, %s74
      %p86 = scmp.eq.s32.totalorder %s22, 1
      %p87 = por %p85, %p86
      %p89 = scmp.ne.s32.totalorder %s74, %s88
      %p90 = scmp.eq.s32.totalorder %s22, 0
      %p91 = por %p89, %p90
      %s92 = ssub.s32 %s16, %s23
      %p93 = scmp.eq.s32.totalorder %s92, 0
      %s95 = sadd.s32 %s94, 1
      %s96 = scalar_select %p93, %s94, %s95
      %p99 = pneg %p93
      %p100 = scmp.eq.s32.totalorder %s16, 1
      %p101 = por %p99, %p100
      %p102 = scmp.ne.s32.totalorder %s94, %s97
      %p103 = scmp.eq.s32.totalorder %s16, 0
      %p104 = por %p102, %p103
      %p105 = scmp.ne.s32.totalorder %s94, %s97
      %p106 = scmp.eq.s32.totalorder %s21, 1
      %p107 = por %p105, %p106
      %p108 = scmp.ne.s32.totalorder %s97, %s98
      %p109 = scmp.eq.s32.totalorder %s21, 0
      %p110 = por %p108, %p109
      %p111 = scmp.ne.s32.totalorder %s97, %s98
      %p112 = scmp.eq.s32.totalorder %s22, 1
      %p113 = por %p111, %p112
      %p115 = scmp.ne.s32.totalorder %s98, %s114
      %p116 = scmp.eq.s32.totalorder %s22, 0
      %p117 = por %p115, %p116
      %p118 = scmp.le.s32.totalorder 1, %s16
      %p119 = scmp.lt.s32.totalorder %s16, 3
      %p120 = pnand %p118, %p119
      %p121 = pneg %p120
      // Predicated region
      $region9: #{tpu_custom_call.1} parent=5 // pred_check
        _
      $region10: #{tpu_custom_call.1} parent=5 // pred_check_branch
        %123 = sbr.rel (%p120) target = $region12
      $region11: #{tpu_custom_call.1} parent=5 // pred_region
        %s124 = ssub.s32 %s16, 1
        // Predicated region
        $region13: #{tpu_custom_call.1} parent=11 // pred_check
          %p125 = pneg %p63
        $region14: #{tpu_custom_call.1} parent=11 // pred_check_branch
          %127 = sbr.rel (%p125) target = $region16
        $region15: #{tpu_custom_call.1} parent=11 // pred_region
          %s129 = ssub.s32 256, 256
          %130 = vsyncadd [#allocation6], %s129
          %s131 = sshll.u32 [#allocation5], 4
          %s132 = int_to_ptr.vmem [resolvable:$true] %s131
          %137 = dma.hbm_to_vmem [thread:$0]  %s1, 256, %s132, [#allocation6], 64, 64, 4
        $region16: #{tpu_custom_call.1} parent=11 // pred_fallthru
          _
        // Predicated region
        $region17: #{tpu_custom_call.1} parent=11 // pred_check
          %p138 = pneg %p84
        $region18: #{tpu_custom_call.1} parent=11 // pred_check_branch
          %140 = sbr.rel (%p138) target = $region20
        $region19: #{tpu_custom_call.1} parent=11 // pred_region
          _
        $region20: #{tpu_custom_call.1} parent=11 // pred_fallthru
          _
      $region12: #{tpu_custom_call.1} parent=5 // pred_fallthru
        _
      %p141 = scmp.lt.s32.totalorder %s16, 2
      // Predicated region
      $region21: #{tpu_custom_call.1} parent=5 // pred_check
        %p142 = pneg %p141
      $region22: #{tpu_custom_call.1} parent=5 // pred_check_branch
        %144 = sbr.rel (%p142) target = $region24
      $region23: #{tpu_custom_call.1} parent=5 // pred_region
        // Predicated region
        $region25: #{tpu_custom_call.1} parent=23 // pred_check
          %p145 = pneg %p36
        $region26: #{tpu_custom_call.1} parent=23 // pred_check_branch
          %147 = sbr.rel (%p145) target = $region28
        $region27: #{tpu_custom_call.1} parent=23 // pred_region
          %s148 = sand.u32 %s26, 1
          %s149 = scalar_lea.sflag [#allocation3], %s148
          %s150 = sand.u32 %s26, 1
          %s151 = smul.addr %s150, 8
          %s152 = scalar_lea.vmem [#allocation2], %s151
          %s153 = smul.u32 2, %s16
          %s155 = ssub.s32 128, 128
          %156 = vsyncadd %s149, %s155
          %s157 = smul.addr %s153, 64
          %s158 = scalar_lea.hbm %s0, %s157
          %s159 = sshll.u32 %s152, 4
          %s160 = int_to_ptr.vmem [resolvable:$true] %s159
          %165 = dma.hbm_to_vmem [thread:$0]  %s158, 128, %s160, %s149, 64, 64, 4
        $region28: #{tpu_custom_call.1} parent=23 // pred_fallthru
          _
      $region24: #{tpu_custom_call.1} parent=5 // pred_fallthru
        _
      %p166 = scmp.le.s32.totalorder 1, %s16
      %p167 = scmp.lt.s32.totalorder %s16, 3
      %p168 = pnand %p166, %p167
      %p169 = pneg %p168
      // Predicated region
      $region29: #{tpu_custom_call.1} parent=5 // pred_check
        _
      $region30: #{tpu_custom_call.1} parent=5 // pred_check_branch
        %171 = sbr.rel (%p168) target = $region32
      $region31: #{tpu_custom_call.1} parent=5 // pred_region
        %s172 = ssub.s32 %s16, 1
        %s173 = sand.u32 %s29, 1
        %s174 = scalar_lea.sflag [#allocation3], %s173
        %s175 = sand.u32 %s29, 1
        %s176 = smul.addr %s175, 8
        %s177 = scalar_lea.vmem [#allocation2], %s176
        // Predicated region
        $region33: #{tpu_custom_call.1} parent=31 // pred_check
          %p178 = pneg %p42
        $region34: #{tpu_custom_call.1} parent=31 // pred_check_branch
          %180 = sbr.rel (%p178) target = $region36
        $region35: #{tpu_custom_call.1} parent=31 // pred_region
          %181 = dma.done %s174, 128
        $region36: #{tpu_custom_call.1} parent=31 // pred_fallthru
          _
        // Predicated region
        $region37: #{tpu_custom_call.1} parent=31 // pred_check
          %p182 = pneg %p63
        $region38: #{tpu_custom_call.1} parent=31 // pred_check_branch
          %184 = sbr.rel (%p182) target = $region40
        $region39: #{tpu_custom_call.1} parent=31 // pred_region
          %185 = dma.done [#allocation6], 256
        $region40: #{tpu_custom_call.1} parent=31 // pred_fallthru
          _
        %s186 = sand.u32 %s29, 1
        %s187 = scalar_lea.sflag [#allocation3], %s186
        %s188 = sand.u32 %s29, 1
        %s189 = smul.addr %s188, 8
        %s190 = scalar_lea.vmem [#allocation2], %s189
        %p191 = pneg %p42
        %p192 = pneg %p39
        %p193 = pneg %p63
        %p194 = pneg %p60
        %p195 = pneg %p84
        %p196 = pneg %p81
        %p197 = pneg %p110
        %p198 = pneg %p107
        %s199 = sand.u32 %s97, 1
        %s200 = scalar_lea.sflag [#allocation4], %s199
        %s201 = sand.u32 %s97, 1
        %s202 = smul.addr %s201, 8
        %s203 = scalar_lea.vmem [#allocation7], %s202
        %s204 = smul.u32 2, %s21
        %s205 = smul.u32 2, %s21
        %v207 = vld [vmem:[%s177] sm:$0xf]
        %v208 = vld [vmem:[%s177 + $0x4] sm:$0xf]
        %v209 = vld [vmem:[#allocation5] sm:$0xf]
        %v210 = vld [vmem:[#allocation5 + $0x4] sm:$0xf]
        %v211 = vld [vmem:[#allocation5 + $0x8] sm:$0xf]
        %v212 = vld [vmem:[#allocation5 + $0xc] sm:$0xf]
        %v213 = vld [vmem:[%s2] sm:$0x1]
        %v215 = vlaneseq
        %v216 = vshrl.u32 %v215, 7
        %v217 = vsub.s32 0, %v216
        %v218 = vrot.slane %v213, %v217
        %v222 = vunpack.c.l.b16 %v207
        %v223 = vunpack.c.l.b16 %v208
        %v224 = vpack.c.b16 %v223, %v222
        %v229 = vunpack.c.l.b16 %v209
        %v230 = vunpack.c.l.b16 %v210
        %v231 = vunpack.c.l.b16 %v211
        %v232 = vunpack.c.l.b16 %v212
        %v233 = vpack.c.b16 %v230, %v229
        %v234 = vpack.c.b16 %v232, %v231
        %vm237 = vcmask 261120
        %v239 = vsel %vm237, %v224, 0
        %241 = vmatprep.subr.bf16.mxu0 0
        %242 = vmatpush1.bf16.msra.mxu0 %v233
        %243 = vmatprep.subr.bf16.mxu0 0
        %244 = vmatpush1.bf16.msra.mxu0 %v234
        %245 = vmatprep.subr.bf16.mxu0 0
        %246 = vmatpush1.bf16.msra.mxu0 0
        %247 = vmatprep.subr.bf16.mxu0 0
        %248 = vmatpush1.bf16.msra.mxu0 0
        %249 = vmatprep.subr.bf16.mxu0 0
        %250 = vmatpush1.bf16.msra.mxu0 0
        %251 = vmatprep.subr.bf16.mxu0 0
        %252 = vmatpush1.bf16.msra.mxu0 0
        %253 = vmatprep.subr.bf16.mxu0 0
        %254 = vmatpush1.bf16.msra.mxu0 0
        %255 = vmatprep.subr.bf16.mxu0 0
        %256 = vmatpush1.bf16.msra.mxu0 0
        %257 = vmatprep.subr.bf16.mxu0 0
        %258 = vmatpush1.bf16.msra.mxu0 0
        %259 = vmatprep.subr.bf16.mxu0 0
        %260 = vmatpush1.bf16.msra.mxu0 0
        %261 = vmatprep.subr.bf16.mxu0 0
        %262 = vmatpush1.bf16.msra.mxu0 0
        %263 = vmatprep.subr.bf16.mxu0 0
        %264 = vmatpush1.bf16.msra.mxu0 0
        %265 = vmatprep.subr.bf16.mxu0 0
        %266 = vmatpush1.bf16.msra.mxu0 0
        %267 = vmatprep.subr.bf16.mxu0 0
        %268 = vmatpush1.bf16.msra.mxu0 0
        %269 = vmatprep.subr.bf16.mxu0 0
        %270 = vmatpush1.bf16.msra.mxu0 0
        %271 = vmatprep.subr.bf16.mxu0 0
        %272 = vmatpush1.bf16.msra.mxu0 0
        %273 = vmatprep.mubr.bf16.mxu0 0
        %274 = vmatmul.mubr.bf16.gmra.mrb[0].mxu0 %v239
        %v275 = vpop.f32.mrb[0].mxu0
        %v276 = vadd.f32 %v218, %v275
        %v277 = vpop.f32.mrb[0].mxu0
        %v278 = vpop.f32.mrb[0].mxu0
        %v279 = vadd.f32 %v218, %v278
        %v280 = vpop.f32.mrb[0].mxu0
        %281 = vdwg.mxu0
        %v282 = vpack.c.bf16 %v279, %v276
        %v284 = vunpack.c.l.b16 %v282
        %v285 = vunpack.c.h.b16 %v282
        %v286 = vpack.c.b16 %v284, %v284
        %v287 = vpack.c.b16 %v285, %v285
        %vm290 = vcmask 257024
        %291 = vst.msk [vmem:[%s203] sm:$0xf] %vm290, %v286
        %292 = vst.msk [vmem:[%s203 + $0x4] sm:$0xf] %vm290, %v287
        %s293 = sand.u32 %s97, 1
        %s294 = scalar_lea.sflag [#allocation4], %s293
        %s295 = sand.u32 %s97, 1
        %s296 = smul.addr %s295, 8
        %s297 = scalar_lea.vmem [#allocation7], %s296
        // Predicated region
        $region41: #{tpu_custom_call.1} parent=31 // pred_check
          %p298 = pneg %p107
        $region42: #{tpu_custom_call.1} parent=31 // pred_check_branch
          %300 = sbr.rel (%p298) target = $region44
        $region43: #{tpu_custom_call.1} parent=31 // pred_region
          %s301 = smul.u32 2, %s21
          %s303 = ssub.s32 128, 128
          %304 = vsyncadd %s294, %s303
          %s305 = smul.addr %s301, 64
          %s306 = scalar_lea.hbm %s3, %s305
          %s307 = sshll.u32 %s297, 4
          %s308 = int_to_ptr.vmem [resolvable:$true] %s307
          %313 = dma.vmem_to_hbm [thread:$0]  %s308, 128, %s306, %s294, 64, 64, 4
        $region44: #{tpu_custom_call.1} parent=31 // pred_fallthru
          _
      $region32: #{tpu_custom_call.1} parent=5 // pred_fallthru
        _
      %p314 = scmp.le.s32.totalorder 2, %s16
      // Predicated region
      $region45: #{tpu_custom_call.1} parent=5 // pred_check
        %p315 = pneg %p314
      $region46: #{tpu_custom_call.1} parent=5 // pred_check_branch
        %317 = sbr.rel (%p315) target = $region48
      $region47: #{tpu_custom_call.1} parent=5 // pred_region
        %s318 = ssub.s32 %s16, 2
        // Predicated region
        $region49: #{tpu_custom_call.1} parent=47 // pred_check
          %p319 = pneg %p113
        $region50: #{tpu_custom_call.1} parent=47 // pred_check_branch
          %321 = sbr.rel (%p319) target = $region52
        $region51: #{tpu_custom_call.1} parent=47 // pred_region
          %s322 = sand.u32 %s98, 1
          %s323 = scalar_lea.sflag [#allocation4], %s322
          %s324 = sand.u32 %s98, 1
          %s325 = smul.addr %s324, 8
          %s326 = scalar_lea.vmem [#allocation7], %s325
          %327 = dma.done %s323, 128
        $region52: #{tpu_custom_call.1} parent=47 // pred_fallthru
          _
      $region48: #{tpu_custom_call.1} parent=5 // pred_fallthru
        _
    $region6: #{tpu_custom_call.1} parent=1 // loop_footer
      %s20 = sadd.s32 1, %s16
    $region7: #{tpu_custom_call.1} parent=1 // loop_footer_branch
      %15 = sbr.rel target = $region3
    $region8: #{tpu_custom_call.1} parent=1 // loop_exit
      _
    %328 = vsyncpa [#allocation3], 1
    %s329 = scalar_lea.sflag [#allocation3], 1
    %330 = vsyncpa %s329, 1
    %331 = vsyncpa [#allocation6], 1
    %332 = vsyncpa [#allocation4], 1
    %s333 = scalar_lea.sflag [#allocation4], 1
    %334 = vsyncpa %s333, 1

</llo_original>
